<compile_context>
chip_gen: v6e
topology: v6e:2x2x1
jax: 0.10.0
libtpu: 0.0.40
codegen_flags: <defaults>
</compile_context>

<pallas_src>
import jax
import jax.numpy as jnp
from jax.experimental import pallas as pl
from jax.experimental.pallas import tpu as pltpu

LANE = 128
MAX_ROW_TILE = 256  # sized for v7x's smaller VMEM; v5e/v6e could go larger

_PARALLEL = pltpu.CompilerParams(dimension_semantics=("parallel",))


# --------------------------------------------------------------------------- #
# helpers
# --------------------------------------------------------------------------- #
def _round_up(v, m):
    return ((v + m - 1) // m) * m


def _pad_cols(a, multiple=LANE):
    pad = (-a.shape[-1]) % multiple
    if pad:
        a = jnp.pad(a, [(0, 0)] * (a.ndim - 1) + [(0, pad)])
    return a


def _pad_rows(a, target_rows):
    pad = target_rows - a.shape[0]
    if pad:
        a = jnp.pad(a, [(0, pad), (0, 0)])
    return a


def _choose_row_tile(n, max_tile=MAX_ROW_TILE):
    """Pick a row tile that divides N (multiple of 8), capped for VMEM."""
    if n <= max_tile:
        return n            # full-extent block is always legal
    if n % 8:
        return n            # fall back to a single full block
    t = max_tile
    while t >= 8:
        if n % t == 0:
            return t
        t //= 2
    return n


# --------------------------------------------------------------------------- #
# kernels
# --------------------------------------------------------------------------- #
def _proj_kernel(x_ref, w_ref, o_ref):
    # o = x @ W    (row tile of x, resident W)
    o_ref[...] = jnp.dot(x_ref[...], w_ref[...], preferred_element_type=jnp.float32)


def _agg_kernel(adj_ref, p_ref, b_ref, o_ref):
    # o = adj_tile @ proj + b
    o_ref[...] = (
        jnp.dot(adj_ref[...], p_ref[...], preferred_element_type=jnp.float32)
        + b_ref[...]
    )


def _agg_res_same_kernel(adj_ref, p_ref, b_ref, h_ref, o_ref):
    # o = relu(adj_tile @ proj + b) + h_tile          (nhid == nclass)
    base = (
        jnp.dot(adj_ref[...], p_ref[...], preferred_element_type=jnp.float32)
        + b_ref[...]
    )
    o_ref[...] = jnp.maximum(base, 0.0) + h_ref[...]


def _agg_res_proj_kernel(adj_ref, p_ref, b_ref, h_ref, wres_ref, bres_ref, o_ref):
    # o = relu(adj_tile @ proj + b) + (h_tile @ Wres + bres)
    base = (
        jnp.dot(adj_ref[...], p_ref[...], preferred_element_type=jnp.float32)
        + b_ref[...]
    )
    res = (
        jnp.dot(h_ref[...], wres_ref[...], preferred_element_type=jnp.float32)
        + bres_ref[...]
    )
    o_ref[...] = jnp.maximum(base, 0.0) + res


# --------------------------------------------------------------------------- #
# pallas_call wrappers
# --------------------------------------------------------------------------- #
def _project(x, w, *, tile_m):
    """Row-tiled  x @ w  with w resident."""
    n, k = x.shape
    f = w.shape[1]
    grid = (n // tile_m,)
    return pl.pallas_call(
        _proj_kernel,
        grid=grid,
        in_specs=[
            pl.BlockSpec((tile_m, k), lambda i: (i, 0)),   # x row tile (streamed)
            pl.BlockSpec((k, f), lambda i: (0, 0)),        # W resident
        ],
        out_specs=pl.BlockSpec((tile_m, f), lambda i: (i, 0)),
        out_shape=jax.ShapeDtypeStruct((n, f), jnp.float32),
        compiler_params=_PARALLEL,
    )(x, w)


def _aggregate(adj, proj, bias, *, tile_m, h=None, wres=None, bres=None):
    """Row-tiled  adj @ proj + bias, optionally fused with the residual branch."""
    n = adj.shape[0]
    f = proj.shape[1]
    grid = (n // tile_m,)

    in_specs = [
        pl.BlockSpec((tile_m, n), lambda i: (i, 0)),  # adj row tile (streamed)
        pl.BlockSpec((n, f), lambda i: (0, 0)),       # projection (resident)
        pl.BlockSpec((1, f), lambda i: (0, 0)),       # bias (resident)
    ]
    args = [adj, proj, bias]

    if h is None:
        kernel = _agg_kernel
    elif wres is None:
        kernel = _agg_res_same_kernel
        in_specs.append(pl.BlockSpec((tile_m, h.shape[1]), lambda i: (i, 0)))
        args.append(h)
    else:
        kernel = _agg_res_proj_kernel
        in_specs += [
            pl.BlockSpec((tile_m, h.shape[1]), lambda i: (i, 0)),  # h row tile
            pl.BlockSpec(wres.shape, lambda i: (0, 0)),            # Wres resident
            pl.BlockSpec((1, bres.shape[1]), lambda i: (0, 0)),    # bres resident
        ]
        args += [h, wres, bres]

    return pl.pallas_call(
        kernel,
        grid=grid,
        in_specs=in_specs,
        out_specs=pl.BlockSpec((tile_m, f), lambda i: (i, 0)),
        out_shape=jax.ShapeDtypeStruct((n, f), jnp.float32),
        compiler_params=_PARALLEL,
    )(*args)


# --------------------------------------------------------------------------- #
# forward
# --------------------------------------------------------------------------- #
def simple_gcn_forward(adj, x, params, *, res_connection=False, get_hidden=False):
    """SimpleGCN forward. params = (W1, b1, W2, b2, Wres, bres) with weights
    already transposed to [in, out] and biases shaped [1, out]."""
    w1, b1, w2, b2, wres, bres = params
    n = adj.shape[0]
    nhid = w1.shape[1]
    nclass = w2.shape[1]
    nhid_p = _round_up(nhid, LANE)

    # Lane-dense feature dims: zero-pad weights/biases to 128-lane multiples.
    # Padding columns stay exactly zero through every layer and are sliced off.
    w1p = _pad_cols(w1)                       # [nfeat,  nhid_p]
    b1p = _pad_cols(b1)                       # [1,      nhid_p]
    w2p = _pad_cols(_pad_rows(w2, nhid_p))    # [nhid_p, nclass_p]
    b2p = _pad_cols(b2)                       # [1,      nclass_p]

    tile_m = _choose_row_tile(n)

    # ---- layer 1:  h = adj @ (x @ W1) + b1        (reassociated) ----
    proj1 = _project(x, w1p, tile_m=tile_m)                  # [n, nhid_p]
    h = _aggregate(adj, proj1, b1p, tile_m=tile_m)           # [n, nhid_p]

    # ---- dropout: eval-mode identity ----
    # TODO(synk): training-mode stochastic dropout not implemented.

    # ---- layer 2:  out = adj @ (h @ W2) + b2  (+ residual from pre-dropout h) ----
    proj2 = _project(h, w2p, tile_m=tile_m)                  # [n, nclass_p]
    if res_connection:
        if nhid == nclass:
            out = _aggregate(adj, proj2, b2p, tile_m=tile_m, h=h)
        else:
            wrp = _pad_cols(_pad_rows(wres, nhid_p))         # [nhid_p, nclass_p]
            brp = _pad_cols(bres)                            # [1,      nclass_p]
            out = _aggregate(adj, proj2, b2p, tile_m=tile_m, h=h, wres=wrp, bres=brp)
    else:
        out = _aggregate(adj, proj2, b2p, tile_m=tile_m)

    out = out[:, :nclass]
    if get_hidden:
        return out, h[:, :nhid]
    return out


# --------------------------------------------------------------------------- #
# init + pure-JAX reference (mirrors the PyTorch module, eval mode)
# --------------------------------------------------------------------------- #
def init_params(key, nfeat, nhid, nclass):
    """xavier_uniform weights; PyTorch-default uniform biases."""
    def xavier(k, fan_out, fan_in):
        limit = (6.0 / (fan_in + fan_out)) ** 0.5
        return jax.random.uniform(k, (fan_out, fan_in), jnp.float32, -limit, limit)

    def bias(k, fan_in, fan_out):
        bound = 1.0 / (fan_in ** 0.5)
        return jax.random.uniform(k, (1, fan_out), jnp.float32, -bound, bound)

    ks = jax.random.split(key, 6)
    W1 = xavier(ks[0], nhid, nfeat);   b1 = bias(ks[1], nfeat, nhid)
    W2 = xavier(ks[2], nclass, nhid);  b2 = bias(ks[3], nhid, nclass)
    Wr = xavier(ks[4], nclass, nhid);  br = bias(ks[5], nhid, nclass)
    # transpose to [in, out] for right-multiplication inside the kernels
    return (W1.T, b1, W2.T, b2, Wr.T, br)


def _reference_forward(adj, x, params, res_connection, get_hidden=False):
    w1, b1, w2, b2, wres, bres = params
    h = (adj @ x) @ w1 + b1
    out = (adj @ h) @ w2 + b2
    if res_connection:
        if w1.shape[1] == w2.shape[1]:
            out = jnp.maximum(out, 0.0) + h
        else:
            out = jnp.maximum(out, 0.0) + (h @ wres + bres)
    if get_hidden:
        return out, h
    return out


# --------------------------------------------------------------------------- #
# demo / self-test
# --------------------------------------------------------------------------- #
if __name__ == "__main__":
    key = jax.random.PRNGKey(0)
    k_adj, k_x, k_par = jax.random.split(key, 3)

    N, nfeat = 16, 32

    # symmetric row-normalized dense adjacency (self-loops included)
    a = (jax.random.uniform(k_adj, (N, N)) > 0.7).astype(jnp.float32)
    a = jnp.maximum(a, a.T) + jnp.eye(N, dtype=jnp.float32)
    adj = a / jnp.sum(a, axis=1, keepdims=True)

    x = jax.random.normal(k_x, (N, nfeat), jnp.float32)

    fwd = jax.jit(simple_gcn_forward, static_argnames=("res_connection", "get_hidden"))

    ok = True
    # Exercise all three kernel variants: plain, residual-projection, residual-identity.
    for (nhid, nclass, res) in ((24, 8, False), (24, 8, True), (8, 8, True)):
        params = init_params(k_par, nfeat, nhid, nclass)

        out, hid = fwd(adj, x, params, res_connection=res, get_hidden=True)
        out, hid = jax.block_until_ready((out, hid))

        ref_out, ref_hid = _reference_forward(adj, x, params, res, get_hidden=True)
        ok &= bool(jnp.allclose(out, ref_out, atol=1e-4, rtol=1e-4))
        ok &= bool(jnp.allclose(hid, ref_hid, atol=1e-4, rtol=1e-4))
        ok &= out.shape == (N, nclass) and hid.shape == (N, nhid)

    if ok:
        print("KERNEL_OK")
</pallas_src>

<mosaic_0001>
module attributes {stable_mosaic.version = 11 : i64} {
  func.func @_proj_kernel(%arg0: i32, %arg1: memref<16x32xf32, #tpu.memory_space<vmem>>, %arg2: memref<32x128xf32, #tpu.memory_space<vmem>>, %arg3: memref<16x128xf32, #tpu.memory_space<vmem>>) attributes {dimension_semantics = [#tpu.dimension_semantics<parallel>], iteration_bounds = array<i64: 1>, scalar_prefetch = 0 : i64, scratch_operands = 0 : i64, tpu.core_type = #tpu.core_type<tc>, window_params = [{transform_indices = @transform_0, window_bounds = array<i64: 16, 32>}, {pipeline_mode = #tpu.pipeline_mode<synchronous>, transform_indices = @transform_1, window_bounds = array<i64: 32, 128>}, {transform_indices = @transform_2, window_bounds = array<i64: 16, 128>}]} {
    %c0 = arith.constant 0 : index
    %c0_0 = arith.constant 0 : index
    %0 = vector.load %arg1[%c0, %c0_0] : memref<16x32xf32, #tpu.memory_space<vmem>>, vector<16x32xf32>
    %c0_1 = arith.constant 0 : index
    %c0_2 = arith.constant 0 : index
    %1 = vector.load %arg2[%c0_1, %c0_2] : memref<32x128xf32, #tpu.memory_space<vmem>>, vector<32x128xf32>
    %cst = arith.constant dense<0.000000e+00> : vector<16x128xf32>
    %2 = tpu.matmul %0, %1, %cst {dimension_numbers = #tpu.dot_dimension_numbers<[1], [0], [0], [1], [0, 0, 1, 1], [], []>} : vector<16x32xf32>, vector<32x128xf32>, vector<16x128xf32> -> vector<16x128xf32>
    %c0_3 = arith.constant 0 : index
    %c0_4 = arith.constant 0 : index
    %3 = vector.load %arg3[%c0_3, %c0_4] : memref<16x128xf32, #tpu.memory_space<vmem>>, vector<16x128xf32>
    tpu.vector_store %arg3[%c0_3, %c0_4], %2 {strides = array<i32>} : memref<16x128xf32, #tpu.memory_space<vmem>>, vector<16x128xf32>,
    return
  }
  func.func @transform_0(%arg0: i32) -> (i32, i32) {
    %c0_i32 = arith.constant 0 : i32
    %c0_i32_0 = arith.constant 0 : i32
    return %arg0, %c0_i32 : i32, i32
  }
  func.func @transform_1(%arg0: i32) -> (i32, i32) {
    %c0_i32 = arith.constant 0 : i32
    %c0_i32_0 = arith.constant 0 : i32
    %c0_i32_1 = arith.constant 0 : i32
    return %c0_i32, %c0_i32_0 : i32, i32
  }
  func.func @transform_2(%arg0: i32) -> (i32, i32) {
    %c0_i32 = arith.constant 0 : i32
    %c0_i32_0 = arith.constant 0 : i32
    return %arg0, %c0_i32 : i32, i32
  }
}

module attributes {stable_mosaic.version = 11 : i64} {
  func.func @_agg_kernel(%arg0: i32, %arg1: memref<16x16xf32, #tpu.memory_space<vmem>>, %arg2: memref<16x128xf32, #tpu.memory_space<vmem>>, %arg3: memref<1x128xf32, #tpu.memory_space<vmem>>, %arg4: memref<16x128xf32, #tpu.memory_space<vmem>>) attributes {dimension_semantics = [#tpu.dimension_semantics<parallel>], iteration_bounds = array<i64: 1>, scalar_prefetch = 0 : i64, scratch_operands = 0 : i64, tpu.core_type = #tpu.core_type<tc>, window_params = [{transform_indices = @transform_0, window_bounds = array<i64: 16, 16>}, {pipeline_mode = #tpu.pipeline_mode<synchronous>, transform_indices = @transform_1, window_bounds = array<i64: 16, 128>}, {pipeline_mode = #tpu.pipeline_mode<synchronous>, transform_indices = @transform_2, window_bounds = array<i64: 1, 128>}, {transform_indices = @transform_3, window_bounds = array<i64: 16, 128>}]} {
    %c0 = arith.constant 0 : index
    %c0_0 = arith.constant 0 : index
    %0 = vector.load %arg1[%c0, %c0_0] : memref<16x16xf32, #tpu.memory_space<vmem>>, vector<16x16xf32>
    %c0_1 = arith.constant 0 : index
    %c0_2 = arith.constant 0 : index
    %1 = vector.load %arg2[%c0_1, %c0_2] : memref<16x128xf32, #tpu.memory_space<vmem>>, vector<16x128xf32>
    %cst = arith.constant dense<0.000000e+00> : vector<16x128xf32>
    %2 = tpu.matmul %0, %1, %cst {dimension_numbers = #tpu.dot_dimension_numbers<[1], [0], [0], [1], [0, 0, 1, 1], [], []>} : vector<16x16xf32>, vector<16x128xf32>, vector<16x128xf32> -> vector<16x128xf32>
    %c0_3 = arith.constant 0 : index
    %c0_4 = arith.constant 0 : index
    %3 = vector.load %arg3[%c0_3, %c0_4] : memref<1x128xf32, #tpu.memory_space<vmem>>, vector<1x128xf32>
    %4 = vector.broadcast %3 : vector<1x128xf32> to vector<16x128xf32>
    %5 = arith.addf %2, %4 : vector<16x128xf32>
    %c0_5 = arith.constant 0 : index
    %c0_6 = arith.constant 0 : index
    %6 = vector.load %arg4[%c0_5, %c0_6] : memref<16x128xf32, #tpu.memory_space<vmem>>, vector<16x128xf32>
    tpu.vector_store %arg4[%c0_5, %c0_6], %5 {strides = array<i32>} : memref<16x128xf32, #tpu.memory_space<vmem>>, vector<16x128xf32>,
    return
  }
  func.func @transform_0(%arg0: i32) -> (i32, i32) {
    %c0_i32 = arith.constant 0 : i32
    %c0_i32_0 = arith.constant 0 : i32
    return %arg0, %c0_i32 : i32, i32
  }
  func.func @transform_1(%arg0: i32) -> (i32, i32) {
    %c0_i32 = arith.constant 0 : i32
    %c0_i32_0 = arith.constant 0 : i32
    %c0_i32_1 = arith.constant 0 : i32
    return %c0_i32, %c0_i32_0 : i32, i32
  }
  func.func @transform_2(%arg0: i32) -> (i32, i32) {
    %c0_i32 = arith.constant 0 : i32
    %c0_i32_0 = arith.constant 0 : i32
    %c0_i32_1 = arith.constant 0 : i32
    return %c0_i32, %c0_i32_0 : i32, i32
  }
  func.func @transform_3(%arg0: i32) -> (i32, i32) {
    %c0_i32 = arith.constant 0 : i32
    %c0_i32_0 = arith.constant 0 : i32
    return %arg0, %c0_i32 : i32, i32
  }
}

module attributes {stable_mosaic.version = 11 : i64} {
  func.func @_proj_kernel(%arg0: i32, %arg1: memref<16x128xf32, #tpu.memory_space<vmem>>, %arg2: memref<128x128xf32, #tpu.memory_space<vmem>>, %arg3: memref<16x128xf32, #tpu.memory_space<vmem>>) attributes {dimension_semantics = [#tpu.dimension_semantics<parallel>], iteration_bounds = array<i64: 1>, scalar_prefetch = 0 : i64, scratch_operands = 0 : i64, tpu.core_type = #tpu.core_type<tc>, window_params = [{transform_indices = @transform_0, window_bounds = array<i64: 16, 128>}, {pipeline_mode = #tpu.pipeline_mode<synchronous>, transform_indices = @transform_1, window_bounds = array<i64: 128, 128>}, {transform_indices = @transform_2, window_bounds = array<i64: 16, 128>}]} {
    %c0 = arith.constant 0 : index
    %c0_0 = arith.constant 0 : index
    %0 = vector.load %arg1[%c0, %c0_0] : memref<16x128xf32, #tpu.memory_space<vmem>>, vector<16x128xf32>
    %c0_1 = arith.constant 0 : index
    %c0_2 = arith.constant 0 : index
    %1 = vector.load %arg2[%c0_1, %c0_2] : memref<128x128xf32, #tpu.memory_space<vmem>>, vector<128x128xf32>
    %cst = arith.constant dense<0.000000e+00> : vector<16x128xf32>
    %2 = tpu.matmul %0, %1, %cst {dimension_numbers = #tpu.dot_dimension_numbers<[1], [0], [0], [1], [0, 0, 1, 1], [], []>} : vector<16x128xf32>, vector<128x128xf32>, vector<16x128xf32> -> vector<16x128xf32>
    %c0_3 = arith.constant 0 : index
    %c0_4 = arith.constant 0 : index
    %3 = vector.load %arg3[%c0_3, %c0_4] : memref<16x128xf32, #tpu.memory_space<vmem>>, vector<16x128xf32>
    tpu.vector_store %arg3[%c0_3, %c0_4], %2 {strides = array<i32>} : memref<16x128xf32, #tpu.memory_space<vmem>>, vector<16x128xf32>,
    return
  }
  func.func @transform_0(%arg0: i32) -> (i32, i32) {
    %c0_i32 = arith.constant 0 : i32
    %c0_i32_0 = arith.constant 0 : i32
    return %arg0, %c0_i32 : i32, i32
  }
  func.func @transform_1(%arg0: i32) -> (i32, i32) {
    %c0_i32 = arith.constant 0 : i32
    %c0_i32_0 = arith.constant 0 : i32
    %c0_i32_1 = arith.constant 0 : i32
    return %c0_i32, %c0_i32_0 : i32, i32
  }
  func.func @transform_2(%arg0: i32) -> (i32, i32) {
    %c0_i32 = arith.constant 0 : i32
    %c0_i32_0 = arith.constant 0 : i32
    return %arg0, %c0_i32 : i32, i32
  }
}

</mosaic_0001>

<llo_original>
// kernel: simple_gcn_forward.4
$region0: #{simple_gcn_forward.4}
  #allocation0 [shape = 'u32[]', space=smem, size = 0x4, offset = 0x4, fixed_abs, tag = 'smem constant byte address 0x4 - core index']
  #allocation1 [shape = 'u32[144,128]{1,0:T(1,128)}', space=vmem, size = 0x12000, scoped, tag = 'internal scratch']
  %s0 = inlined_call_operand.vmem [shape: f32[16,32], index: 0, kind: input, shape index: {}]
  %s1 = inlined_call_operand.vmem [shape: f32[32,128], index: 1, kind: input, shape index: {}]
  %s2 = inlined_call_operand.vmem [shape: f32[16,128], index: 2, kind: output, shape index: {}]
  %s3 = sld [smem:[#allocation0]]
  $region18: #{simple_gcn_forward.4} parent=0
    _
  %s5 = ssub.s32 1, %s3
  %s6 = scalar_select 0, %s5, %s3
  // Predicated region
  $region2: #{simple_gcn_forward.4} parent=0 // pred_check
    _
  $region3: #{simple_gcn_forward.4} parent=0 // pred_check_branch
    %8 = sbr.rel (0) target = $region5
  $region4: #{simple_gcn_forward.4} parent=0 // pred_region
    _
  $region5: #{simple_gcn_forward.4} parent=0 // pred_fallthru
    _
  // Predicated region
  $region6: #{simple_gcn_forward.4} parent=0 // pred_check
    _
  $region7: #{simple_gcn_forward.4} parent=0 // pred_check_branch
    %10 = sbr.rel (0) target = $region9
  $region8: #{simple_gcn_forward.4} parent=0 // pred_region
    _
  $region9: #{simple_gcn_forward.4} parent=0 // pred_fallthru
    _
  %v11 = vld [vmem:[%s0] sm:$0xff]
  %v12 = vld [vmem:[%s0 + $0x8] sm:$0xff]
  %v13 = vld [vmem:[%s1] sm:$0xff]
  %v14 = vld [vmem:[%s1 + $0x8] sm:$0xff]
  %v15 = vld [vmem:[%s1 + $0x10] sm:$0xff]
  %v16 = vld [vmem:[%s1 + $0x18] sm:$0xff]
  %vm17 = vcmask 261120
  %v19 = vsel %vm17, %v11, 0
  %v22 = vsel %vm17, %v12, 0
  %24 = vmatprep.subr.mxu0 0.0
  %25 = vmatpush1.msra.mxu0 0.0
  %26 = vmatprep.subr.mxu0 0.0
  %27 = vmatpush1.msra.mxu0 0.0
  %28 = vmatprep.subr.mxu0 0.0
  %29 = vmatpush1.msra.mxu0 0.0
  %30 = vmatprep.subr.mxu0 0.0
  %31 = vmatpush1.msra.mxu0 0.0
  %32 = vmatprep.subr.mxu0 0.0
  %33 = vmatpush1.msra.mxu0 0.0
  %34 = vmatprep.subr.mxu0 0.0
  %35 = vmatpush1.msra.mxu0 0.0
  %36 = vmatprep.subr.mxu0 0.0
  %37 = vmatpush1.msra.mxu0 0.0
  %38 = vmatprep.subr.mxu0 0.0
  %39 = vmatpush1.msra.mxu0 0.0
  %40 = vmatprep.subr.mxu0 0.0
  %41 = vmatpush1.msra.mxu0 0.0
  %42 = vmatprep.subr.mxu0 0.0
  %43 = vmatpush1.msra.mxu0 0.0
  %44 = vmatprep.subr.mxu0 0.0
  %45 = vmatpush1.msra.mxu0 0.0
  %46 = vmatprep.subr.mxu0 0.0
  %47 = vmatpush1.msra.mxu0 0.0
  %48 = vmatprep.subr.mxu0 0.0
  %49 = vmatpush1.msra.mxu0 %v16
  %50 = vmatprep.subr.mxu0 0.0
  %51 = vmatpush1.msra.mxu0 %v15
  %52 = vmatprep.subr.mxu0 0.0
  %53 = vmatpush1.msra.mxu0 %v14
  %54 = vmatprep.subr.mxu0 0.0
  %55 = vmatpush1.msra.mxu0 %v13
  %56 = vmatprep.subr.mxu0 0.0
  %57 = vmatpush2.msra.mxu0 0.0
  %58 = vmatprep.subr.mxu0 0.0
  %59 = vmatpush2.msra.mxu0 0.0
  %60 = vmatprep.subr.mxu0 0.0
  %61 = vmatpush2.msra.mxu0 0.0
  %62 = vmatprep.subr.mxu0 0.0
  %63 = vmatpush2.msra.mxu0 0.0
  %64 = vmatprep.subr.mxu0 0.0
  %65 = vmatpush2.msra.mxu0 0.0
  %66 = vmatprep.subr.mxu0 0.0
  %67 = vmatpush2.msra.mxu0 0.0
  %68 = vmatprep.subr.mxu0 0.0
  %69 = vmatpush2.msra.mxu0 0.0
  %70 = vmatprep.subr.mxu0 0.0
  %71 = vmatpush2.msra.mxu0 0.0
  %72 = vmatprep.subr.mxu0 0.0
  %73 = vmatpush2.msra.mxu0 0.0
  %74 = vmatprep.subr.mxu0 0.0
  %75 = vmatpush2.msra.mxu0 0.0
  %76 = vmatprep.subr.mxu0 0.0
  %77 = vmatpush2.msra.mxu0 0.0
  %78 = vmatprep.subr.mxu0 0.0
  %79 = vmatpush2.msra.mxu0 0.0
  %80 = vmatprep.subr.mxu0 0.0
  %81 = vmatpush2.msra.mxu0 0.0
  %82 = vmatprep.subr.mxu0 0.0
  %83 = vmatpush2.msra.mxu0 0.0
  %84 = vmatprep.subr.mxu0 0.0
  %85 = vmatpush2.msra.mxu0 0.0
  %86 = vmatprep.subr.mxu0 0.0
  %87 = vmatpush2.msra.mxu0 0.0
  %88 = vmatprep.mubr.f32.mxu0 0.0
  %89 = vmatmul.mubr.f32.gmra.mxu0 %v19
  %v90 = vpop.f32.mrf.mxu0
  %v91 = vadd.f32 0.0, %v90
  %v92 = vpop.f32.mrf.mxu0
  %93 = vmatprep.mubr.f32.mxu0 0.0
  %94 = vmatmul.mubr.f32.gmra.mxu0 %v22
  %v95 = vpop.f32.mrf.mxu0
  %v96 = vadd.f32 0.0, %v95
  %v97 = vpop.f32.mrf.mxu0
  %98 = vdwg.mxu0
  %99 = vst [vmem:[%s2] sm:$0xff] %v91
  %100 = vst [vmem:[%s2 + $0x8] sm:$0xff] %v96
  // Predicated region
  $region10: #{simple_gcn_forward.4} parent=0 // pred_check
    _
  $region11: #{simple_gcn_forward.4} parent=0 // pred_check_branch
    %102 = sbr.rel (0) target = $region13
  $region12: #{simple_gcn_forward.4} parent=0 // pred_region
    _
  $region13: #{simple_gcn_forward.4} parent=0 // pred_fallthru
    _
  // Predicated region
  $region14: #{simple_gcn_forward.4} parent=0 // pred_check
    _
  $region15: #{simple_gcn_forward.4} parent=0 // pred_check_branch
    %104 = sbr.rel (0) target = $region17
  $region16: #{simple_gcn_forward.4} parent=0 // pred_region
    _
  $region17: #{simple_gcn_forward.4} parent=0 // pred_fallthru
    _

// kernel: simple_gcn_forward.6
$region0: #{simple_gcn_forward.6}
  #allocation0 [shape = 'u32[]', space=smem, size = 0x4, offset = 0x4, fixed_abs, tag = 'smem constant byte address 0x4 - core index']
  #allocation1 [shape = 'u32[144,128]{1,0:T(1,128)}', space=vmem, size = 0x12000, scoped, tag = 'internal scratch']
  %s0 = inlined_call_operand.vmem [shape: f32[16,128], index: 0, kind: input, shape index: {}]
  %s1 = inlined_call_operand.vmem [shape: f32[128,128], index: 1, kind: input, shape index: {}]
  %s2 = inlined_call_operand.vmem [shape: f32[16,128], index: 2, kind: output, shape index: {}]
  %s3 = sld [smem:[#allocation0]]
  $region18: #{simple_gcn_forward.6} parent=0
    _
  %s5 = ssub.s32 1, %s3
  %s6 = scalar_select 0, %s5, %s3
  // Predicated region
  $region2: #{simple_gcn_forward.6} parent=0 // pred_check
    _
  $region3: #{simple_gcn_forward.6} parent=0 // pred_check_branch
    %8 = sbr.rel (0) target = $region5
  $region4: #{simple_gcn_forward.6} parent=0 // pred_region
    _
  $region5: #{simple_gcn_forward.6} parent=0 // pred_fallthru
    _
  // Predicated region
  $region6: #{simple_gcn_forward.6} parent=0 // pred_check
    _
  $region7: #{simple_gcn_forward.6} parent=0 // pred_check_branch
    %10 = sbr.rel (0) target = $region9
  $region8: #{simple_gcn_forward.6} parent=0 // pred_region
    _
  $region9: #{simple_gcn_forward.6} parent=0 // pred_fallthru
    _
  %v11 = vld [vmem:[%s0] sm:$0xff]
  %v12 = vld [vmem:[%s0 + $0x8] sm:$0xff]
  %v13 = vld [vmem:[%s1] sm:$0xff]
  %v14 = vld [vmem:[%s1 + $0x8] sm:$0xff]
  %v15 = vld [vmem:[%s1 + $0x10] sm:$0xff]
  %v16 = vld [vmem:[%s1 + $0x18] sm:$0xff]
  %v17 = vld [vmem:[%s1 + $0x20] sm:$0xff]
  %v18 = vld [vmem:[%s1 + $0x28] sm:$0xff]
  %v19 = vld [vmem:[%s1 + $0x30] sm:$0xff]
  %v20 = vld [vmem:[%s1 + $0x38] sm:$0xff]
  %v21 = vld [vmem:[%s1 + $0x40] sm:$0xff]
  %v22 = vld [vmem:[%s1 + $0x48] sm:$0xff]
  %v23 = vld [vmem:[%s1 + $0x50] sm:$0xff]
  %v24 = vld [vmem:[%s1 + $0x58] sm:$0xff]
  %v25 = vld [vmem:[%s1 + $0x60] sm:$0xff]
  %v26 = vld [vmem:[%s1 + $0x68] sm:$0xff]
  %v27 = vld [vmem:[%s1 + $0x70] sm:$0xff]
  %v28 = vld [vmem:[%s1 + $0x78] sm:$0xff]
  %29 = vmatprep.subr.mxu0 0.0
  %30 = vmatpush1.msra.mxu0 %v28
  %31 = vmatprep.subr.mxu0 0.0
  %32 = vmatpush1.msra.mxu0 %v27
  %33 = vmatprep.subr.mxu0 0.0
  %34 = vmatpush1.msra.mxu0 %v26
  %35 = vmatprep.subr.mxu0 0.0
  %36 = vmatpush1.msra.mxu0 %v25
  %37 = vmatprep.subr.mxu0 0.0
  %38 = vmatpush1.msra.mxu0 %v24
  %39 = vmatprep.subr.mxu0 0.0
  %40 = vmatpush1.msra.mxu0 %v23
  %41 = vmatprep.subr.mxu0 0.0
  %42 = vmatpush1.msra.mxu0 %v22
  %43 = vmatprep.subr.mxu0 0.0
  %44 = vmatpush1.msra.mxu0 %v21
  %45 = vmatprep.subr.mxu0 0.0
  %46 = vmatpush1.msra.mxu0 %v20
  %47 = vmatprep.subr.mxu0 0.0
  %48 = vmatpush1.msra.mxu0 %v19
  %49 = vmatprep.subr.mxu0 0.0
  %50 = vmatpush1.msra.mxu0 %v18
  %51 = vmatprep.subr.mxu0 0.0
  %52 = vmatpush1.msra.mxu0 %v17
  %53 = vmatprep.subr.mxu0 0.0
  %54 = vmatpush1.msra.mxu0 %v16
  %55 = vmatprep.subr.mxu0 0.0
  %56 = vmatpush1.msra.mxu0 %v15
  %57 = vmatprep.subr.mxu0 0.0
  %58 = vmatpush1.msra.mxu0 %v14
  %59 = vmatprep.subr.mxu0 0.0
  %60 = vmatpush1.msra.mxu0 %v13
  %61 = vmatprep.subr.mxu0 0.0
  %62 = vmatpush2.msra.mxu0 0.0
  %63 = vmatprep.subr.mxu0 0.0
  %64 = vmatpush2.msra.mxu0 0.0
  %65 = vmatprep.subr.mxu0 0.0
  %66 = vmatpush2.msra.mxu0 0.0
  %67 = vmatprep.subr.mxu0 0.0
  %68 = vmatpush2.msra.mxu0 0.0
  %69 = vmatprep.subr.mxu0 0.0
  %70 = vmatpush2.msra.mxu0 0.0
  %71 = vmatprep.subr.mxu0 0.0
  %72 = vmatpush2.msra.mxu0 0.0
  %73 = vmatprep.subr.mxu0 0.0
  %74 = vmatpush2.msra.mxu0 0.0
  %75 = vmatprep.subr.mxu0 0.0
  %76 = vmatpush2.msra.mxu0 0.0
  %77 = vmatprep.subr.mxu0 0.0
  %78 = vmatpush2.msra.mxu0 0.0
  %79 = vmatprep.subr.mxu0 0.0
  %80 = vmatpush2.msra.mxu0 0.0
  %81 = vmatprep.subr.mxu0 0.0
  %82 = vmatpush2.msra.mxu0 0.0
  %83 = vmatprep.subr.mxu0 0.0
  %84 = vmatpush2.msra.mxu0 0.0
  %85 = vmatprep.subr.mxu0 0.0
  %86 = vmatpush2.msra.mxu0 0.0
  %87 = vmatprep.subr.mxu0 0.0
  %88 = vmatpush2.msra.mxu0 0.0
  %89 = vmatprep.subr.mxu0 0.0
  %90 = vmatpush2.msra.mxu0 0.0
  %91 = vmatprep.subr.mxu0 0.0
  %92 = vmatpush2.msra.mxu0 0.0
  %93 = vmatprep.mubr.f32.mxu0 0.0
  %94 = vmatmul.mubr.f32.gmra.mxu0 %v11
  %v95 = vpop.f32.mrf.mxu0
  %v96 = vadd.f32 0.0, %v95
  %v97 = vpop.f32.mrf.mxu0
  %98 = vmatprep.mubr.f32.mxu0 0.0
  %99 = vmatmul.mubr.f32.gmra.mxu0 %v12
  %v100 = vpop.f32.mrf.mxu0
  %v101 = vadd.f32 0.0, %v100
  %v102 = vpop.f32.mrf.mxu0
  %103 = vdwg.mxu0
  %104 = vst [vmem:[%s2] sm:$0xff] %v96
  %105 = vst [vmem:[%s2 + $0x8] sm:$0xff] %v101
  // Predicated region
  $region10: #{simple_gcn_forward.6} parent=0 // pred_check
    _
  $region11: #{simple_gcn_forward.6} parent=0 // pred_check_branch
    %107 = sbr.rel (0) target = $region13
  $region12: #{simple_gcn_forward.6} parent=0 // pred_region
    _
  $region13: #{simple_gcn_forward.6} parent=0 // pred_fallthru
    _
  // Predicated region
  $region14: #{simple_gcn_forward.6} parent=0 // pred_check
    _
  $region15: #{simple_gcn_forward.6} parent=0 // pred_check_branch
    %109 = sbr.rel (0) target = $region17
  $region16: #{simple_gcn_forward.6} parent=0 // pred_region
    _
  $region17: #{simple_gcn_forward.6} parent=0 // pred_fallthru
    _

// kernel: simple_gcn_forward.5
$region0: #{simple_gcn_forward.5}
  #allocation0 [shape = 'u32[]', space=smem, size = 0x4, offset = 0x4, fixed_abs, tag = 'smem constant byte address 0x4 - core index']
  #allocation1 [shape = 'u32[144,128]{1,0:T(1,128)}', space=vmem, size = 0x12000, scoped, tag = 'internal scratch']
  %s0 = inlined_call_operand.vmem [shape: f32[16,16], index: 0, kind: input, shape index: {}]
  %s1 = inlined_call_operand.vmem [shape: f32[16,128], index: 1, kind: input, shape index: {}]
  %s2 = inlined_call_operand.vmem [shape: f32[1,128], index: 2, kind: input, shape index: {}]
  %s3 = inlined_call_operand.vmem [shape: f32[16,128], index: 3, kind: output, shape index: {}]
  %s4 = sld [smem:[#allocation0]]
  $region22: #{simple_gcn_forward.5} parent=0
    _
  %s6 = ssub.s32 1, %s4
  %s7 = scalar_select 0, %s6, %s4
  // Predicated region
  $region2: #{simple_gcn_forward.5} parent=0 // pred_check
    _
  $region3: #{simple_gcn_forward.5} parent=0 // pred_check_branch
    %9 = sbr.rel (0) target = $region5
  $region4: #{simple_gcn_forward.5} parent=0 // pred_region
    _
  $region5: #{simple_gcn_forward.5} parent=0 // pred_fallthru
    _
  // Predicated region
  $region6: #{simple_gcn_forward.5} parent=0 // pred_check
    _
  $region7: #{simple_gcn_forward.5} parent=0 // pred_check_branch
    %11 = sbr.rel (0) target = $region9
  $region8: #{simple_gcn_forward.5} parent=0 // pred_region
    _
  $region9: #{simple_gcn_forward.5} parent=0 // pred_fallthru
    _
  // Predicated region
  $region10: #{simple_gcn_forward.5} parent=0 // pred_check
    _
  $region11: #{simple_gcn_forward.5} parent=0 // pred_check_branch
    %13 = sbr.rel (0) target = $region13
  $region12: #{simple_gcn_forward.5} parent=0 // pred_region
    _
  $region13: #{simple_gcn_forward.5} parent=0 // pred_fallthru
    _
  %v14 = vld [vmem:[%s0] sm:$0xff]
  %v15 = vld [vmem:[%s0 + $0x8] sm:$0xff]
  %v16 = vld [vmem:[%s1] sm:$0xff]
  %v17 = vld [vmem:[%s1 + $0x8] sm:$0xff]
  %v18 = vld [vmem:[%s2] sm:$0x1]
  %v20 = vlaneseq
  %v21 = vshrl.u32 %v20, 7
  %v22 = vsub.s32 0, %v21
  %v23 = vrot.slane %v18, %v22
  %vm25 = vcmask 130048
  %v27 = vsel %vm25, %v14, 0
  %v30 = vsel %vm25, %v15, 0
  %32 = vmatprep.subr.mxu0 0.0
  %33 = vmatpush1.msra.mxu0 0.0
  %34 = vmatprep.subr.mxu0 0.0
  %35 = vmatpush1.msra.mxu0 0.0
  %36 = vmatprep.subr.mxu0 0.0
  %37 = vmatpush1.msra.mxu0 0.0
  %38 = vmatprep.subr.mxu0 0.0
  %39 = vmatpush1.msra.mxu0 0.0
  %40 = vmatprep.subr.mxu0 0.0
  %41 = vmatpush1.msra.mxu0 0.0
  %42 = vmatprep.subr.mxu0 0.0
  %43 = vmatpush1.msra.mxu0 0.0
  %44 = vmatprep.subr.mxu0 0.0
  %45 = vmatpush1.msra.mxu0 0.0
  %46 = vmatprep.subr.mxu0 0.0
  %47 = vmatpush1.msra.mxu0 0.0
  %48 = vmatprep.subr.mxu0 0.0
  %49 = vmatpush1.msra.mxu0 0.0
  %50 = vmatprep.subr.mxu0 0.0
  %51 = vmatpush1.msra.mxu0 0.0
  %52 = vmatprep.subr.mxu0 0.0
  %53 = vmatpush1.msra.mxu0 0.0
  %54 = vmatprep.subr.mxu0 0.0
  %55 = vmatpush1.msra.mxu0 0.0
  %56 = vmatprep.subr.mxu0 0.0
  %57 = vmatpush1.msra.mxu0 0.0
  %58 = vmatprep.subr.mxu0 0.0
  %59 = vmatpush1.msra.mxu0 0.0
  %60 = vmatprep.subr.mxu0 0.0
  %61 = vmatpush1.msra.mxu0 %v17
  %62 = vmatprep.subr.mxu0 0.0
  %63 = vmatpush1.msra.mxu0 %v16
  %64 = vmatprep.subr.mxu0 0.0
  %65 = vmatpush2.msra.mxu0 0.0
  %66 = vmatprep.subr.mxu0 0.0
  %67 = vmatpush2.msra.mxu0 0.0
  %68 = vmatprep.subr.mxu0 0.0
  %69 = vmatpush2.msra.mxu0 0.0
  %70 = vmatprep.subr.mxu0 0.0
  %71 = vmatpush2.msra.mxu0 0.0
  %72 = vmatprep.subr.mxu0 0.0
  %73 = vmatpush2.msra.mxu0 0.0
  %74 = vmatprep.subr.mxu0 0.0
  %75 = vmatpush2.msra.mxu0 0.0
  %76 = vmatprep.subr.mxu0 0.0
  %77 = vmatpush2.msra.mxu0 0.0
  %78 = vmatprep.subr.mxu0 0.0
  %79 = vmatpush2.msra.mxu0 0.0
  %80 = vmatprep.subr.mxu0 0.0
  %81 = vmatpush2.msra.mxu0 0.0
  %82 = vmatprep.subr.mxu0 0.0
  %83 = vmatpush2.msra.mxu0 0.0
  %84 = vmatprep.subr.mxu0 0.0
  %85 = vmatpush2.msra.mxu0 0.0
  %86 = vmatprep.subr.mxu0 0.0
  %87 = vmatpush2.msra.mxu0 0.0
  %88 = vmatprep.subr.mxu0 0.0
  %89 = vmatpush2.msra.mxu0 0.0
  %90 = vmatprep.subr.mxu0 0.0
  %91 = vmatpush2.msra.mxu0 0.0
  %92 = vmatprep.subr.mxu0 0.0
  %93 = vmatpush2.msra.mxu0 0.0
  %94 = vmatprep.subr.mxu0 0.0
  %95 = vmatpush2.msra.mxu0 0.0
  %96 = vmatprep.mubr.f32.mxu0 0.0
  %97 = vmatmul.mubr.f32.gmra.mxu0 %v27
  %v98 = vpop.f32.mrf.mxu0
  %v99 = vadd.f32 %v23, %v98
  %v100 = vpop.f32.mrf.mxu0
  %101 = vmatprep.mubr.f32.mxu0 0.0
  %102 = vmatmul.mubr.f32.gmra.mxu0 %v30
  %v103 = vpop.f32.mrf.mxu0
  %v104 = vadd.f32 %v23, %v103
  %v105 = vpop.f32.mrf.mxu0
  %106 = vdwg.mxu0
  %107 = vst [vmem:[%s3] sm:$0xff] %v99
  %108 = vst [vmem:[%s3 + $0x8] sm:$0xff] %v104
  // Predicated region
  $region14: #{simple_gcn_forward.5} parent=0 // pred_check
    _
  $region15: #{simple_gcn_forward.5} parent=0 // pred_check_branch
    %110 = sbr.rel (0) target = $region17
  $region16: #{simple_gcn_forward.5} parent=0 // pred_region
    _
  $region17: #{simple_gcn_forward.5} parent=0 // pred_fallthru
    _
  // Predicated region
  $region18: #{simple_gcn_forward.5} parent=0 // pred_check
    _
  $region19: #{simple_gcn_forward.5} parent=0 // pred_check_branch
    %112 = sbr.rel (0) target = $region21
  $region20: #{simple_gcn_forward.5} parent=0 // pred_region
    _
  $region21: #{simple_gcn_forward.5} parent=0 // pred_fallthru
    _

</llo_original>
